<compile_context>
chip_gen: v7x
topology: tpu7x:2x2x1
jax: 0.10.0
libtpu: 0.0.40
codegen_flags: <defaults>
</compile_context>

<pallas_src>
import functools

import jax
import jax.numpy as jnp
from jax.experimental import pallas as pl
from jax.experimental.pallas import tpu as pltpu


def _relu_kernel(x_ref, o_ref):
    # Elementwise ReLU on the whole VMEM tile (single VPU op).
    o_ref[...] = jnp.maximum(x_ref[...], jnp.zeros((), x_ref.dtype))


def _chip_class() -> str:
    """Coarse TPU-generation detection for block-size / VMEM-budget choices."""
    try:
        kind = jax.devices()[0].device_kind.lower()
    except Exception:  # pragma: no cover - no device info available
        return "unknown"
    if "v5 lite" in kind or "v5e" in kind or "v5lite" in kind:
        return "v5e"
    if "v6" in kind:
        return "v6e"
    if "7x" in kind or "v7" in kind:
        return "v7x"
    return "unknown"


@functools.partial(jax.jit, static_argnames=("donate",))
def tudui_forward(x: jax.Array, donate: bool = False) -> jax.Array:
    """Forward pass of Tudui: out = ReLU(x). Shape/dtype preserved.

    Set donate=True only when the caller donates `x` (enables in-place
    input/output aliasing without a defensive copy).
    """
    orig_shape = x.shape
    dtype = x.dtype
    total = x.size
    if total == 0:
        return x

    itemsize = jnp.dtype(dtype).itemsize
    # Dtype-aware sublane packing: 8 (f32) / 16 (bf16) / 32 (int8 / fp8).
    sublane = max(8, 32 // itemsize)

    # Lane width: largest of {1024, 512, 256, 128} that divides the flat
    # length -> no pad / slice copies.  Any multiple of 128 keeps the output
    # stores unmasked; block size in *bytes* (the thing that matters for a
    # streaming kernel) is chosen independently below.
    lane = next((c for c in (1024, 512, 256, 128) if total % c == 0), 128)
    padded = pl.cdiv(total, lane) * lane

    x_flat = jnp.ravel(x)
    if padded != total:
        # Last resort for ragged sizes (flat length not a multiple of 128).
        # Zero is ReLU-neutral; the tail is sliced off again below.
        x_flat = jnp.pad(x_flat, (0, padded - total))
    rows = padded // lane
    x2d = x_flat.reshape(rows, lane)

    # Generation-dependent block size and VMEM budget.
    chip = _chip_class()
    if chip == "v7x":
        # ~3.2 TB/s HBM per core: 8 MiB blocks keep the ~0.35 us per-grid-step
        # overhead amortized.  2 in + 2 out buffers = 32 MiB == default scoped
        # limit, so raise it (physical VMEM is 64 MiB per core).
        target_block_bytes = 8 * 1024 * 1024
        vmem_limit_bytes = 48 * 1024 * 1024
        two_core = True
    elif chip == "v6e":
        # 16 MiB pipeline footprint fits the 32 MiB default scoped VMEM.
        target_block_bytes = 4 * 1024 * 1024
        vmem_limit_bytes = None
        two_core = False
    else:
        # v5e (16 MiB default scoped VMEM) and unknown chips: stay at 2 MiB,
        # which already saturates ~0.8 TB/s HBM.
        target_block_bytes = 2 * 1024 * 1024
        vmem_limit_bytes = None
        two_core = False

    tile_rows = max(sublane, target_block_bytes // (lane * itemsize))
    if tile_rows >= rows:
        tile_rows = rows  # single full-height block (== full array dim)
    else:
        tile_rows = (tile_rows // sublane) * sublane  # packed-tile aligned

    # On a 2-TensorCore chip (v7x), guarantee >= 2 grid steps for mid-sized
    # tensors so the "parallel" axis can actually be split across the cores.
    if (
        two_core
        and pl.cdiv(rows, tile_rows) < 2
        and rows >= 2 * sublane
        and padded * itemsize > (1 << 20)
    ):
        tile_rows = min(rows, pl.cdiv(pl.cdiv(rows, 2), sublane) * sublane)

    grid = (pl.cdiv(rows, tile_rows),)

    call_kwargs = {}
    if donate:
        # Only beneficial when the caller donates x; otherwise the must-alias
        # output would force XLA to insert a defensive input copy.
        call_kwargs["input_output_aliases"] = {0: 0}

    out2d = pl.pallas_call(
        _relu_kernel,
        out_shape=jax.ShapeDtypeStruct((rows, lane), dtype),
        grid_spec=pltpu.PrefetchScalarGridSpec(
            num_scalar_prefetch=0,
            grid=grid,
            in_specs=[pl.BlockSpec((tile_rows, lane), lambda i: (i, 0))],
            out_specs=pl.BlockSpec((tile_rows, lane), lambda i: (i, 0)),
        ),
        compiler_params=pltpu.CompilerParams(
            # Megacore sharding on v7x; no-op on single-TC v5e/v6e.
            dimension_semantics=("parallel",),
            vmem_limit_bytes=vmem_limit_bytes,
        ),
        cost_estimate=pl.CostEstimate(
            flops=padded,
            transcendentals=0,
            bytes_accessed=2 * padded * itemsize,
        ),
        **call_kwargs,
    )(x2d)

    if padded != total:
        return out2d.reshape(-1)[:total].reshape(orig_shape)
    return out2d.reshape(orig_shape)


if __name__ == "__main__":
    # The Tudui module has no parameters (just nn.ReLU), so nothing to init.
    key = jax.random.PRNGKey(0)
    # Small NCHW input consistent with the module's elementwise forward.
    x = jax.random.normal(key, (2, 4, 16, 16), dtype=jnp.float32)

    out = tudui_forward(x)
    out = jax.block_until_ready(out)

    # Reference check against plain JAX ReLU.
    ref = jnp.maximum(x, 0.0)
    assert out.shape == x.shape and out.dtype == x.dtype
    assert bool(jnp.allclose(out, ref)), "mismatch vs reference ReLU"

    print("KERNEL_OK")
</pallas_src>

<mosaic_0001>
module attributes {stable_mosaic.version = 11 : i64} {
  func.func @_relu_kernel(%arg0: i32, %arg1: memref<2x1024xf32, #tpu.memory_space<vmem>>, %arg2: memref<2x1024xf32, #tpu.memory_space<vmem>>) attributes {dimension_semantics = [#tpu.dimension_semantics<parallel>], iteration_bounds = array<i64: 1>, scalar_prefetch = 0 : i64, scratch_operands = 0 : i64, tpu.core_type = #tpu.core_type<tc>, window_params = [{transform_indices = @transform_0, window_bounds = array<i64: 2, 1024>}, {transform_indices = @transform_1, window_bounds = array<i64: 2, 1024>}]} {
    %c0 = arith.constant 0 : index
    %c0_0 = arith.constant 0 : index
    %0 = vector.load %arg1[%c0, %c0_0] : memref<2x1024xf32, #tpu.memory_space<vmem>>, vector<2x1024xf32>
    %cst = arith.constant 0.000000e+00 : f32
    %1 = vector.broadcast %cst : f32 to vector<2x1024xf32>
    %2 = arith.maximumf %0, %1 : vector<2x1024xf32>
    %c0_1 = arith.constant 0 : index
    %c0_2 = arith.constant 0 : index
    %3 = vector.load %arg2[%c0_1, %c0_2] : memref<2x1024xf32, #tpu.memory_space<vmem>>, vector<2x1024xf32>
    tpu.vector_store %arg2[%c0_1, %c0_2], %2 {strides = array<i32>} : memref<2x1024xf32, #tpu.memory_space<vmem>>, vector<2x1024xf32>,
    return
  }
  func.func @transform_0(%arg0: i32) -> (i32, i32) {
    %c0_i32 = arith.constant 0 : i32
    %c0_i32_0 = arith.constant 0 : i32
    return %arg0, %c0_i32 : i32, i32
  }
  func.func @transform_1(%arg0: i32) -> (i32, i32) {
    %c0_i32 = arith.constant 0 : i32
    %c0_i32_0 = arith.constant 0 : i32
    return %arg0, %c0_i32 : i32, i32
  }
}

</mosaic_0001>

<llo_original>
// kernel: tudui_forward.1
$region0: #{tudui_forward.1}
  #allocation0 [shape = 'u32[]', space=smem, size = 0x4, offset = 0x4, fixed_abs, tag = 'smem constant byte address 0x4 - core index']
  #allocation1 [shape = 'u32[144,128]{1,0:T(1,128)}', space=vmem, size = 0x12000, scoped, tag = 'internal scratch']
  %s0 = inlined_call_operand.vmem [shape: f32[2,1024], index: 0, kind: input, shape index: {}]
  %s1 = inlined_call_operand.vmem [shape: f32[2,1024], index: 1, kind: output, shape index: {}]
  %s2 = sld [smem:[#allocation0]]
  $region14: #{tudui_forward.1} parent=0
    _
  %s4 = ssub.s32 1, %s2
  %s5 = scalar_select 0, %s4, %s2
  // Predicated region
  $region2: #{tudui_forward.1} parent=0 // pred_check
    _
  $region3: #{tudui_forward.1} parent=0 // pred_check_branch
    %7 = sbr.rel (0) target = $region5
  $region4: #{tudui_forward.1} parent=0 // pred_region
    _
  $region5: #{tudui_forward.1} parent=0 // pred_fallthru
    _
  %v8 = vld [vmem:[%s0] sm:$0xff]
  %v9 = vld [vmem:[%s0 + $0x8] sm:$0xff]
  %v10 = vmax.f32 %v8, 0.0
  %v11 = vmax.f32 %v9, 0.0
  %12 = vst [vmem:[%s1] sm:$0xff] %v10
  %13 = vst [vmem:[%s1 + $0x8] sm:$0xff] %v11
  // Predicated region
  $region6: #{tudui_forward.1} parent=0 // pred_check
    _
  $region7: #{tudui_forward.1} parent=0 // pred_check_branch
    %15 = sbr.rel (0) target = $region9
  $region8: #{tudui_forward.1} parent=0 // pred_region
    _
  $region9: #{tudui_forward.1} parent=0 // pred_fallthru
    _
  // Predicated region
  $region10: #{tudui_forward.1} parent=0 // pred_check
    _
  $region11: #{tudui_forward.1} parent=0 // pred_check_branch
    %17 = sbr.rel (0) target = $region13
  $region12: #{tudui_forward.1} parent=0 // pred_region
    _
  $region13: #{tudui_forward.1} parent=0 // pred_fallthru
    _

</llo_original>
